<compile_context>
chip_gen: v5e
topology: v5e:2x2
jax: 0.10.0
libtpu: 0.0.40
codegen_flags: <defaults>
</compile_context>

<pallas_src>
import functools

import jax
import jax.numpy as jnp
import numpy as np
from jax.experimental import pallas as pl
from jax.experimental.pallas import tpu as pltpu


def _bn_pad_flat_kernel(params_ref, x_ref, o_ref, *, h, w, pad):
    """One grid step: (cb, h*w) input rows -> (cb, hp*wp) padded output rows.

    params_ref : (cb, 2) f32 -- column 0 = per-channel BN scale,
                 column 1 = shift (shift is also the border pad value).
    x_ref      : (cb, h*w)   flattened input planes.
    o_ref      : (cb, hp*wp) flattened padded output planes.
    """
    cb = x_ref.shape[0]
    hp, wp = h + 2 * pad, w + 2 * pad

    params = params_ref[...]          # (cb, 2) f32
    scale = params[:, 0:1]            # (cb, 1)
    shift = params[:, 1:2]            # (cb, 1)

    # Eval-mode BN on the hot path: f32 math, one cast at the end (v5e-friendly).
    y = (x_ref[...].astype(jnp.float32) * scale + shift).astype(o_ref.dtype)

    if pad == 0:
        o_ref[...] = y
        return

    # Phase 1: fill the whole lane-dense tile with the pad value (== BN shift).
    o_ref[...] = jnp.broadcast_to(shift.astype(o_ref.dtype), (cb, hp * wp))

    # Phase 2: overwrite the interior, one image row at a time (static slices,
    # unrolled at trace time -> h masked row stores per block of cb channels).
    for r in range(h):
        dst = (r + pad) * wp + pad
        o_ref[:, dst:dst + w] = y[:, r * w:r * w + w]


def bn_and_pad(x, weight, bias, running_mean, running_var,
               *, eps=1e-5, pad_pixels=1):
    """JAX/Pallas equivalent of BNAndPadLayer.forward (eval mode), NCHW."""
    N, C, H, W = x.shape
    p = int(pad_pixels)
    Hp, Wp = H + 2 * p, W + 2 * p
    NC = N * C

    # Per-channel affine fold: y = x * scale + shift; pad value == shift.
    inv_std = 1.0 / jnp.sqrt(running_var.astype(jnp.float32) + eps)
    if weight is not None:
        scale = weight.astype(jnp.float32) * inv_std
    else:
        scale = inv_std
    shift = -running_mean.astype(jnp.float32) * scale
    if bias is not None:
        shift = shift + bias.astype(jnp.float32)

    # Pack per-channel params into one (NC, 2) f32 array (single DMA stream),
    # and flatten the input to lane-dense (NC, H*W) -- both reshapes are free
    # (contiguous) on the HBM side.
    params = jnp.stack([scale, shift], axis=-1)          # (C, 2)
    params_nc = jnp.tile(params, (N, 1))                 # (NC, 2)
    x_flat = x.reshape(NC, H * W)

    # Channel-block size from the *VMEM-padded* per-channel footprint
    # (last dim padded to 128 lanes).  Target ~6 MiB per block set so the
    # double-buffered total stays around 12 MiB -- far below the 32 MiB scoped
    # VMEM limit and v7x's 64 MiB physical VMEM.
    def _rup(a, b):
        return -(-a // b) * b

    itemsize = jnp.dtype(x.dtype).itemsize
    per_ch = (_rup(H * W, 128) + _rup(Hp * Wp, 128)) * itemsize + 128 * 4
    block_budget = 6 * 1024 * 1024
    cb = max(1, block_budget // per_ch)
    if NC >= 16:
        # Keep >= 2 grid steps so the parallel axis can shard across both TCs.
        cb = min(cb, max(8, (NC // 2 // 8) * 8))
    cb = min(cb, NC)
    if cb < NC:
        cb = max(8, (cb // 8) * 8)     # sublane-aligned partial blocks
        cb = min(cb, NC)

    grid = (pl.cdiv(NC, cb),)
    kernel = functools.partial(_bn_pad_flat_kernel, h=H, w=W, pad=p)

    out_flat = pl.pallas_call(
        kernel,
        out_shape=jax.ShapeDtypeStruct((NC, Hp * Wp), x.dtype),
        grid=grid,
        in_specs=[
            pl.BlockSpec((cb, 2), lambda i: (i, 0)),          # scale/shift
            pl.BlockSpec((cb, H * W), lambda i: (i, 0)),      # x (lane-dense)
        ],
        out_specs=pl.BlockSpec((cb, Hp * Wp), lambda i: (i, 0)),
        compiler_params=pltpu.CompilerParams(
            dimension_semantics=("parallel",),
            vmem_limit_bytes=32 * 1024 * 1024),
    )(params_nc, x_flat)

    return out_flat.reshape(N, C, Hp, Wp)


def _reference(x, weight, bias, running_mean, running_var, *, eps, pad):
    """Pure-JAX reference mirroring the PyTorch forward (eval mode)."""
    inv_std = 1.0 / jnp.sqrt(running_var + eps)
    y = (x - running_mean[None, :, None, None]) * inv_std[None, :, None, None]
    if weight is not None:
        y = y * weight[None, :, None, None] + bias[None, :, None, None]
        pad_values = bias - running_mean * weight * inv_std
    else:
        pad_values = -running_mean * inv_std
    if pad <= 0:
        return y
    out = jnp.pad(y, ((0, 0), (0, 0), (pad, pad), (pad, pad)))
    pv = pad_values[None, :, None, None]
    out = out.at[:, :, 0:pad, :].set(pv)
    out = out.at[:, :, -pad:, :].set(pv)
    out = out.at[:, :, :, 0:pad].set(pv)
    out = out.at[:, :, :, -pad:].set(pv)
    return out


if __name__ == "__main__":
    key = jax.random.PRNGKey(0)
    k_x, k_w, k_b, k_m, k_v = jax.random.split(key, 5)

    N, C, H, W = 2, 4, 16, 16
    eps = 1e-5

    x = jax.random.normal(k_x, (N, C, H, W), dtype=jnp.float32)
    weight = jax.random.normal(k_w, (C,), dtype=jnp.float32) * 0.1 + 1.0
    bias = jax.random.normal(k_b, (C,), dtype=jnp.float32) * 0.1
    running_mean = jax.random.normal(k_m, (C,), dtype=jnp.float32) * 0.2
    running_var = jax.random.uniform(k_v, (C,), dtype=jnp.float32,
                                     minval=0.5, maxval=1.5)

    # Affine BN, pad_pixels=1 (the module's typical configuration).
    out = bn_and_pad(x, weight, bias, running_mean, running_var,
                     eps=eps, pad_pixels=1)
    out = jax.block_until_ready(out)
    ref = _reference(x, weight, bias, running_mean, running_var, eps=eps, pad=1)
    np.testing.assert_allclose(np.asarray(out), np.asarray(ref),
                               rtol=1e-5, atol=1e-5)

    # affine=False path, wider padding.
    out2 = bn_and_pad(x, None, None, running_mean, running_var,
                      eps=eps, pad_pixels=2)
    out2 = jax.block_until_ready(out2)
    ref2 = _reference(x, None, None, running_mean, running_var, eps=eps, pad=2)
    np.testing.assert_allclose(np.asarray(out2), np.asarray(ref2),
                               rtol=1e-5, atol=1e-5)

    print("KERNEL_OK")
</pallas_src>

<mosaic_0001>
module attributes {stable_mosaic.version = 11 : i64} {
  func.func @_bn_pad_flat_kernel(%arg0: i32, %arg1: memref<8x2xf32, #tpu.memory_space<vmem>>, %arg2: memref<8x256xf32, #tpu.memory_space<vmem>>, %arg3: memref<8x324xf32, #tpu.memory_space<vmem>>) attributes {dimension_semantics = [#tpu.dimension_semantics<parallel>], iteration_bounds = array<i64: 1>, scalar_prefetch = 0 : i64, scratch_operands = 0 : i64, tpu.core_type = #tpu.core_type<tc>, window_params = [{transform_indices = @transform_0, window_bounds = array<i64: 8, 2>}, {transform_indices = @transform_1, window_bounds = array<i64: 8, 256>}, {transform_indices = @transform_2, window_bounds = array<i64: 8, 324>}]} {
    %c0 = arith.constant 0 : index
    %c0_0 = arith.constant 0 : index
    %0 = vector.load %arg1[%c0, %c0_0] : memref<8x2xf32, #tpu.memory_space<vmem>>, vector<8x2xf32>
    %1 = vector.extract_strided_slice %0 {offsets = [0, 0], sizes = [8, 1], strides = [1, 1]} : vector<8x2xf32> to vector<8x1xf32>
    %2 = vector.extract_strided_slice %0 {offsets = [0, 1], sizes = [8, 1], strides = [1, 1]} : vector<8x2xf32> to vector<8x1xf32>
    %c0_1 = arith.constant 0 : index
    %c0_2 = arith.constant 0 : index
    %3 = vector.load %arg2[%c0_1, %c0_2] : memref<8x256xf32, #tpu.memory_space<vmem>>, vector<8x256xf32>
    %4 = vector.broadcast %1 : vector<8x1xf32> to vector<8x256xf32>
    %5 = arith.mulf %3, %4 : vector<8x256xf32>
    %6 = vector.broadcast %2 : vector<8x1xf32> to vector<8x256xf32>
    %7 = arith.addf %5, %6 : vector<8x256xf32>
    %8 = vector.shape_cast %2 : vector<8x1xf32> to vector<8x1xf32>
    %9 = vector.broadcast %8 : vector<8x1xf32> to vector<8x324xf32>
    %c0_3 = arith.constant 0 : index
    %c0_4 = arith.constant 0 : index
    %10 = vector.load %arg3[%c0_3, %c0_4] : memref<8x324xf32, #tpu.memory_space<vmem>>, vector<8x324xf32>
    tpu.vector_store %arg3[%c0_3, %c0_4], %9 {strides = array<i32>} : memref<8x324xf32, #tpu.memory_space<vmem>>, vector<8x324xf32>,
    %11 = vector.extract_strided_slice %7 {offsets = [0, 0], sizes = [8, 16], strides = [1, 1]} : vector<8x256xf32> to vector<8x16xf32>
    %c0_5 = arith.constant 0 : index
    %c19 = arith.constant 19 : index
    %12 = vector.load %arg3[%c0_5, %c19] : memref<8x324xf32, #tpu.memory_space<vmem>>, vector<8x16xf32>
    tpu.vector_store %arg3[%c0_5, %c19], %11 {strides = array<i32>} : memref<8x324xf32, #tpu.memory_space<vmem>>, vector<8x16xf32>,
    %13 = vector.extract_strided_slice %7 {offsets = [0, 16], sizes = [8, 16], strides = [1, 1]} : vector<8x256xf32> to vector<8x16xf32>
    %c0_6 = arith.constant 0 : index
    %c37 = arith.constant 37 : index
    %14 = vector.load %arg3[%c0_6, %c37] : memref<8x324xf32, #tpu.memory_space<vmem>>, vector<8x16xf32>
    tpu.vector_store %arg3[%c0_6, %c37], %13 {strides = array<i32>} : memref<8x324xf32, #tpu.memory_space<vmem>>, vector<8x16xf32>,
    %15 = vector.extract_strided_slice %7 {offsets = [0, 32], sizes = [8, 16], strides = [1, 1]} : vector<8x256xf32> to vector<8x16xf32>
    %c0_7 = arith.constant 0 : index
    %c55 = arith.constant 55 : index
    %16 = vector.load %arg3[%c0_7, %c55] : memref<8x324xf32, #tpu.memory_space<vmem>>, vector<8x16xf32>
    tpu.vector_store %arg3[%c0_7, %c55], %15 {strides = array<i32>} : memref<8x324xf32, #tpu.memory_space<vmem>>, vector<8x16xf32>,
    %17 = vector.extract_strided_slice %7 {offsets = [0, 48], sizes = [8, 16], strides = [1, 1]} : vector<8x256xf32> to vector<8x16xf32>
    %c0_8 = arith.constant 0 : index
    %c73 = arith.constant 73 : index
    %18 = vector.load %arg3[%c0_8, %c73] : memref<8x324xf32, #tpu.memory_space<vmem>>, vector<8x16xf32>
    tpu.vector_store %arg3[%c0_8, %c73], %17 {strides = array<i32>} : memref<8x324xf32, #tpu.memory_space<vmem>>, vector<8x16xf32>,
    %19 = vector.extract_strided_slice %7 {offsets = [0, 64], sizes = [8, 16], strides = [1, 1]} : vector<8x256xf32> to vector<8x16xf32>
    %c0_9 = arith.constant 0 : index
    %c91 = arith.constant 91 : index
    %20 = vector.load %arg3[%c0_9, %c91] : memref<8x324xf32, #tpu.memory_space<vmem>>, vector<8x16xf32>
    tpu.vector_store %arg3[%c0_9, %c91], %19 {strides = array<i32>} : memref<8x324xf32, #tpu.memory_space<vmem>>, vector<8x16xf32>,
    %21 = vector.extract_strided_slice %7 {offsets = [0, 80], sizes = [8, 16], strides = [1, 1]} : vector<8x256xf32> to vector<8x16xf32>
    %c0_10 = arith.constant 0 : index
    %c109 = arith.constant 109 : index
    %22 = vector.load %arg3[%c0_10, %c109] : memref<8x324xf32, #tpu.memory_space<vmem>>, vector<8x16xf32>
    tpu.vector_store %arg3[%c0_10, %c109], %21 {strides = array<i32>} : memref<8x324xf32, #tpu.memory_space<vmem>>, vector<8x16xf32>,
    %23 = vector.extract_strided_slice %7 {offsets = [0, 96], sizes = [8, 16], strides = [1, 1]} : vector<8x256xf32> to vector<8x16xf32>
    %c0_11 = arith.constant 0 : index
    %c127 = arith.constant 127 : index
    %24 = vector.load %arg3[%c0_11, %c127] : memref<8x324xf32, #tpu.memory_space<vmem>>, vector<8x16xf32>
    tpu.vector_store %arg3[%c0_11, %c127], %23 {strides = array<i32>} : memref<8x324xf32, #tpu.memory_space<vmem>>, vector<8x16xf32>,
    %25 = vector.extract_strided_slice %7 {offsets = [0, 112], sizes = [8, 16], strides = [1, 1]} : vector<8x256xf32> to vector<8x16xf32>
    %c0_12 = arith.constant 0 : index
    %c145 = arith.constant 145 : index
    %26 = vector.load %arg3[%c0_12, %c145] : memref<8x324xf32, #tpu.memory_space<vmem>>, vector<8x16xf32>
    tpu.vector_store %arg3[%c0_12, %c145], %25 {strides = array<i32>} : memref<8x324xf32, #tpu.memory_space<vmem>>, vector<8x16xf32>,
    %27 = vector.extract_strided_slice %7 {offsets = [0, 128], sizes = [8, 16], strides = [1, 1]} : vector<8x256xf32> to vector<8x16xf32>
    %c0_13 = arith.constant 0 : index
    %c163 = arith.constant 163 : index
    %28 = vector.load %arg3[%c0_13, %c163] : memref<8x324xf32, #tpu.memory_space<vmem>>, vector<8x16xf32>
    tpu.vector_store %arg3[%c0_13, %c163], %27 {strides = array<i32>} : memref<8x324xf32, #tpu.memory_space<vmem>>, vector<8x16xf32>,
    %29 = vector.extract_strided_slice %7 {offsets = [0, 144], sizes = [8, 16], strides = [1, 1]} : vector<8x256xf32> to vector<8x16xf32>
    %c0_14 = arith.constant 0 : index
    %c181 = arith.constant 181 : index
    %30 = vector.load %arg3[%c0_14, %c181] : memref<8x324xf32, #tpu.memory_space<vmem>>, vector<8x16xf32>
    tpu.vector_store %arg3[%c0_14, %c181], %29 {strides = array<i32>} : memref<8x324xf32, #tpu.memory_space<vmem>>, vector<8x16xf32>,
    %31 = vector.extract_strided_slice %7 {offsets = [0, 160], sizes = [8, 16], strides = [1, 1]} : vector<8x256xf32> to vector<8x16xf32>
    %c0_15 = arith.constant 0 : index
    %c199 = arith.constant 199 : index
    %32 = vector.load %arg3[%c0_15, %c199] : memref<8x324xf32, #tpu.memory_space<vmem>>, vector<8x16xf32>
    tpu.vector_store %arg3[%c0_15, %c199], %31 {strides = array<i32>} : memref<8x324xf32, #tpu.memory_space<vmem>>, vector<8x16xf32>,
    %33 = vector.extract_strided_slice %7 {offsets = [0, 176], sizes = [8, 16], strides = [1, 1]} : vector<8x256xf32> to vector<8x16xf32>
    %c0_16 = arith.constant 0 : index
    %c217 = arith.constant 217 : index
    %34 = vector.load %arg3[%c0_16, %c217] : memref<8x324xf32, #tpu.memory_space<vmem>>, vector<8x16xf32>
    tpu.vector_store %arg3[%c0_16, %c217], %33 {strides = array<i32>} : memref<8x324xf32, #tpu.memory_space<vmem>>, vector<8x16xf32>,
    %35 = vector.extract_strided_slice %7 {offsets = [0, 192], sizes = [8, 16], strides = [1, 1]} : vector<8x256xf32> to vector<8x16xf32>
    %c0_17 = arith.constant 0 : index
    %c235 = arith.constant 235 : index
    %36 = vector.load %arg3[%c0_17, %c235] : memref<8x324xf32, #tpu.memory_space<vmem>>, vector<8x16xf32>
    tpu.vector_store %arg3[%c0_17, %c235], %35 {strides = array<i32>} : memref<8x324xf32, #tpu.memory_space<vmem>>, vector<8x16xf32>,
    %37 = vector.extract_strided_slice %7 {offsets = [0, 208], sizes = [8, 16], strides = [1, 1]} : vector<8x256xf32> to vector<8x16xf32>
    %c0_18 = arith.constant 0 : index
    %c253 = arith.constant 253 : index
    %38 = vector.load %arg3[%c0_18, %c253] : memref<8x324xf32, #tpu.memory_space<vmem>>, vector<8x16xf32>
    tpu.vector_store %arg3[%c0_18, %c253], %37 {strides = array<i32>} : memref<8x324xf32, #tpu.memory_space<vmem>>, vector<8x16xf32>,
    %39 = vector.extract_strided_slice %7 {offsets = [0, 224], sizes = [8, 16], strides = [1, 1]} : vector<8x256xf32> to vector<8x16xf32>
    %c0_19 = arith.constant 0 : index
    %c271 = arith.constant 271 : index
    %40 = vector.load %arg3[%c0_19, %c271] : memref<8x324xf32, #tpu.memory_space<vmem>>, vector<8x16xf32>
    tpu.vector_store %arg3[%c0_19, %c271], %39 {strides = array<i32>} : memref<8x324xf32, #tpu.memory_space<vmem>>, vector<8x16xf32>,
    %41 = vector.extract_strided_slice %7 {offsets = [0, 240], sizes = [8, 16], strides = [1, 1]} : vector<8x256xf32> to vector<8x16xf32>
    %c0_20 = arith.constant 0 : index
    %c289 = arith.constant 289 : index
    %42 = vector.load %arg3[%c0_20, %c289] : memref<8x324xf32, #tpu.memory_space<vmem>>, vector<8x16xf32>
    tpu.vector_store %arg3[%c0_20, %c289], %41 {strides = array<i32>} : memref<8x324xf32, #tpu.memory_space<vmem>>, vector<8x16xf32>,
    return
  }
  func.func @transform_0(%arg0: i32) -> (i32, i32) {
    %c0_i32 = arith.constant 0 : i32
    %c0_i32_0 = arith.constant 0 : i32
    return %arg0, %c0_i32 : i32, i32
  }
  func.func @transform_1(%arg0: i32) -> (i32, i32) {
    %c0_i32 = arith.constant 0 : i32
    %c0_i32_0 = arith.constant 0 : i32
    return %arg0, %c0_i32 : i32, i32
  }
  func.func @transform_2(%arg0: i32) -> (i32, i32) {
    %c0_i32 = arith.constant 0 : i32
    %c0_i32_0 = arith.constant 0 : i32
    return %arg0, %c0_i32 : i32, i32
  }
}

</mosaic_0001>

<llo_original>
// kernel: tpu_custom_call.1
$region0: #{tpu_custom_call.1}
  #allocation0 [shape = 'u32[]', space=smem, size = 0x4, offset = 0x4, fixed_abs, tag = 'smem constant byte address 0x4 - core index']
  #allocation1 [shape = 'u32[72,128]{1,0:T(1,128)}', space=vmem, size = 0x9000, scoped, tag = 'internal scratch']
  %s0 = inlined_call_operand.vmem [shape: f32[8,2], index: 0, kind: input, shape index: {}]
  %s1 = inlined_call_operand.hbm [shape: f32[8,256], index: 1, kind: input, shape index: {}]
  %s2 = inlined_call_operand.hbm [shape: f32[8,324], index: 2, kind: output, shape index: {}]
  %s3 = sld [smem:[#allocation0]]
  $region22: #{tpu_custom_call.1} parent=0
    _
  %s5 = ssub.s32 1, %s3
  %s6 = scalar_select 0, %s5, %s3
  $region1: #{tpu_custom_call.1} parent=0
    #allocation2 [shape = 'u8[8192]{0}', space=vmem, size = 0x2000, scoped, tag = 'input window, operand 1, single buffered']
    #allocation3 [shape = 's32[1]{0}', space=sflag, size = 0x4, scoped, tag = 'scoped memory for tpu_custom_call.1']
    #allocation4 [shape = 's32[1]{0}', space=sflag, size = 0x4, scoped, tag = 'scoped memory for tpu_custom_call.1']
    #allocation5 [shape = 'u8[12288]{0}', space=vmem, size = 0x3000, scoped, tag = 'output window, operand 0, single buffered']
    %7 = vsyncpa [#allocation3], 0
    %8 = vsyncpa [#allocation4], 0
    // Predicated region
    $region2: #{tpu_custom_call.1} parent=1 // pred_check
      _
    $region3: #{tpu_custom_call.1} parent=1 // pred_check_branch
      %10 = sbr.rel (0) target = $region5
    $region4: #{tpu_custom_call.1} parent=1 // pred_region
      _
    $region5: #{tpu_custom_call.1} parent=1 // pred_fallthru
      _
    // Predicated region
    $region6: #{tpu_custom_call.1} parent=1 // pred_check
      _
    $region7: #{tpu_custom_call.1} parent=1 // pred_check_branch
      %12 = sbr.rel (0) target = $region9
    $region8: #{tpu_custom_call.1} parent=1 // pred_region
      %14 = vsyncadd [#allocation3], 0
      %s16 = sshll.u32 %s1, 4
      %s17 = int_to_ptr.hbm [resolvable:$true] %s16
      %s18 = sshll.u32 [#allocation2], 4
      %s19 = int_to_ptr.vmem [resolvable:$true] %s18
      %21 = dma.hbm_to_vmem [thread:$0]  %s17, 256, %s19, [#allocation3]
    $region9: #{tpu_custom_call.1} parent=1 // pred_fallthru
      _
    // Predicated region
    $region10: #{tpu_custom_call.1} parent=1 // pred_check
      _
    $region11: #{tpu_custom_call.1} parent=1 // pred_check_branch
      %23 = sbr.rel (0) target = $region13
    $region12: #{tpu_custom_call.1} parent=1 // pred_region
      %25 = dma.done [#allocation3], 256
    $region13: #{tpu_custom_call.1} parent=1 // pred_fallthru
      _
    %v26 = vld [vmem:[%s0] sm:$0xff]
    %v27 = vld [vmem:[#allocation2] sm:$0xff]
    %v28 = vld [vmem:[#allocation2 + $0x8] sm:$0xff]
    %30 = vset.pattern.permute.xlu0 0
    %31 = vperm.xlu0 %30, %v26
    %v32 = vpop.permute.xlu0 %31
    %v34 = vmul.f32 %v27, %v32
    %v35 = vmul.f32 %v28, %v32
    %36 = vset.pattern.permute.xlu0 1
    %37 = vperm.xlu0 %36, %v26
    %v38 = vpop.permute.xlu0 %37
    %v40 = vadd.f32 %v34, %v38
    %v41 = vadd.f32 %v35, %v38
    %42 = vst [vmem:[#allocation5] sm:$0xff] %v38
    %43 = vst [vmem:[#allocation5 + $0x8] sm:$0xff] %v38
    %vm44 = vcmask 556032
    %45 = vst.msk [vmem:[#allocation5 + $0x10] sm:$0xff] %vm44, %v38
    %47 = vrot.lane.b32.xlu0 %v40, 19
    %v48 = vpop.permute.xlu0 %47
    %vm50 = vcmask 285848
    %51 = vst.msk [vmem:[#allocation5] sm:$0xff] %vm50, %v48
    %52 = vrot.lane.b32.xlu0 %v40, 21
    %v53 = vpop.permute.xlu0 %52
    %vm55 = vcmask 433448
    %56 = vst.msk [vmem:[#allocation5] sm:$0xff] %vm55, %v53
    %57 = vrot.lane.b32.xlu0 %v40, 23
    %v58 = vpop.permute.xlu0 %57
    %vm60 = vcmask 581048
    %61 = vst.msk [vmem:[#allocation5] sm:$0xff] %vm60, %v58
    %62 = vrot.lane.b32.xlu0 %v40, 25
    %v63 = vpop.permute.xlu0 %62
    %vm65 = vcmask 728648
    %66 = vst.msk [vmem:[#allocation5] sm:$0xff] %vm65, %v63
    %67 = vrot.lane.b32.xlu0 %v40, 27
    %v68 = vpop.permute.xlu0 %67
    %vm70 = vcmask 876248
    %71 = vst.msk [vmem:[#allocation5] sm:$0xff] %vm70, %v68
    %72 = vrot.lane.b32.xlu0 %v40, 29
    %v73 = vpop.permute.xlu0 %72
    %vm75 = vcmask 1023848
    %76 = vst.msk [vmem:[#allocation5] sm:$0xff] %vm75, %v73
    %77 = vrot.lane.b32.xlu0 %v40, 31
    %v78 = vpop.permute.xlu0 %77
    %vm80 = vcmask 1048568
    %81 = vst.msk [vmem:[#allocation5] sm:$0xff] %vm80, %v78
    %vm82 = vcmask 121856
    %83 = vst.msk [vmem:[#allocation5 + $0x8] sm:$0xff] %vm82, %v78
    %84 = vrot.lane.b32.xlu0 %v40, 33
    %v85 = vpop.permute.xlu0 %84
    %vm87 = vcmask 269448
    %88 = vst.msk [vmem:[#allocation5 + $0x8] sm:$0xff] %vm87, %v85
    %90 = vrot.lane.b32.xlu0 %v41, 35
    %v91 = vpop.permute.xlu0 %90
    %vm93 = vcmask 417048
    %94 = vst.msk [vmem:[#allocation5 + $0x8] sm:$0xff] %vm93, %v91
    %95 = vrot.lane.b32.xlu0 %v41, 37
    %v96 = vpop.permute.xlu0 %95
    %vm98 = vcmask 564648
    %99 = vst.msk [vmem:[#allocation5 + $0x8] sm:$0xff] %vm98, %v96
    %100 = vrot.lane.b32.xlu0 %v41, 39
    %v101 = vpop.permute.xlu0 %100
    %vm103 = vcmask 712248
    %104 = vst.msk [vmem:[#allocation5 + $0x8] sm:$0xff] %vm103, %v101
    %105 = vrot.lane.b32.xlu0 %v41, 41
    %v106 = vpop.permute.xlu0 %105
    %vm108 = vcmask 859848
    %109 = vst.msk [vmem:[#allocation5 + $0x8] sm:$0xff] %vm108, %v106
    %110 = vrot.lane.b32.xlu0 %v41, 43
    %v111 = vpop.permute.xlu0 %110
    %vm113 = vcmask 1007448
    %114 = vst.msk [vmem:[#allocation5 + $0x8] sm:$0xff] %vm113, %v111
    %115 = vrot.lane.b32.xlu0 %v41, 45
    %v116 = vpop.permute.xlu0 %115
    %vm118 = vcmask 1048552
    %119 = vst.msk [vmem:[#allocation5 + $0x8] sm:$0xff] %vm118, %v116
    %vm120 = vcmask 105472
    %121 = vst.msk [vmem:[#allocation5 + $0x10] sm:$0xff] %vm120, %v116
    %122 = vrot.lane.b32.xlu0 %v41, 47
    %v123 = vpop.permute.xlu0 %122
    %vm125 = vcmask 253048
    %126 = vst.msk [vmem:[#allocation5 + $0x10] sm:$0xff] %vm125, %v123
    %127 = vrot.lane.b32.xlu0 %v41, 49
    %v128 = vpop.permute.xlu0 %127
    %vm130 = vcmask 400648
    %131 = vst.msk [vmem:[#allocation5 + $0x10] sm:$0xff] %vm130, %v128
    // Predicated region
    $region14: #{tpu_custom_call.1} parent=1 // pred_check
      _
    $region15: #{tpu_custom_call.1} parent=1 // pred_check_branch
      %133 = sbr.rel (0) target = $region17
    $region16: #{tpu_custom_call.1} parent=1 // pred_region
      %135 = vsyncadd [#allocation4], 0
      %s137 = sshll.u32 [#allocation5], 4
      %s138 = int_to_ptr.vmem [resolvable:$true] %s137
      %s139 = sshll.u32 %s2, 4
      %s140 = int_to_ptr.hbm [resolvable:$true] %s139
      %142 = dma.vmem_to_hbm [thread:$0]  %s138, 384, %s140, [#allocation4]
    $region17: #{tpu_custom_call.1} parent=1 // pred_fallthru
      _
    // Predicated region
    $region18: #{tpu_custom_call.1} parent=1 // pred_check
      _
    $region19: #{tpu_custom_call.1} parent=1 // pred_check_branch
      %144 = sbr.rel (0) target = $region21
    $region20: #{tpu_custom_call.1} parent=1 // pred_region
      %146 = dma.done [#allocation4], 384
    $region21: #{tpu_custom_call.1} parent=1 // pred_fallthru
      _
    %147 = vsyncpa [#allocation3], 1
    %148 = vsyncpa [#allocation4], 1

</llo_original>
